<compile_context>
chip_gen: v5e
topology: v5e:2x2
jax: 0.10.0
libtpu: 0.0.40
codegen_flags: <defaults>
</compile_context>

<pallas_src>
import jax
import jax.numpy as jnp
from jax.experimental import pallas as pl
from jax.experimental.pallas import tpu as pltpu

D_IN = 300      # word-vector features
D_H1 = 100      # l1 out
D_H2 = 50       # l12 out == LSTM input size
D_LSTM = 25     # LSTM hidden size
D_GATES = 4 * D_LSTM   # 100
N_LAYERS = 3    # LSTM layers
D_H3 = 20       # l2 out
N_CLS = 10      # classes
SLOPE = 0.7     # leaky-relu slope used by the reference


def _leaky_relu(x, slope=SLOPE):
    return jnp.where(x >= 0, x, slope * x)


def _sigmoid(x):
    # Divide-free sigmoid: one EUP tanh + one FMA (sigmoid(x) = 0.5*tanh(x/2)+0.5).
    return 0.5 * jnp.tanh(0.5 * x) + 0.5


def _round_up(n, m):
    return ((n + m - 1) // m) * m


def _choose_row_tile(n):
    # HBM-bandwidth-bound streaming: prefer large row tiles so the ~0.35us
    # per-grid-step pipeline overhead is amortized; a (1024, 300) f32 tile is
    # ~1.5 MiB (x2 double buffering) -> fits v5e/v6e/v7x VMEM easily.
    for cand in (1024, 512, 256, 128):
        if n >= cand:
            return cand
    return _round_up(max(n, 8), 8)


# ----------------------------------------------------------------------------
# Kernel 1: per-token MLP front-end + hoisted layer-0 gate projection
#   Linear 300->100, LeakyReLU, Linear 100->50, LeakyReLU, Linear 50->100 (+b0)
# ----------------------------------------------------------------------------
def _token_mlp_kernel(x_ref, w1_ref, b1_ref, w2_ref, b2_ref, wg_ref, bg_ref,
                      o_ref):
    h = jnp.dot(x_ref[...], w1_ref[...],
                preferred_element_type=jnp.float32) + b1_ref[...]
    h = _leaky_relu(h)
    h = jnp.dot(h, w2_ref[...],
                preferred_element_type=jnp.float32) + b2_ref[...]
    h = _leaky_relu(h)
    # Layer-0 LSTM input projection (hoisted off the serial recurrence path).
    g = jnp.dot(h, wg_ref[...],
                preferred_element_type=jnp.float32) + bg_ref[...]
    o_ref[...] = g.astype(o_ref.dtype)


def token_mlp_gates(x_tokens, w1, b1, w12, b12, wih0, bias0):
    """(N, 300) -> (N_pad, 100) layer-0 gate pre-activations (caller slices)."""
    n, d = x_tokens.shape
    assert d == D_IN
    tile = _choose_row_tile(n)
    n_pad = _round_up(n, tile)
    if n_pad != n:
        x_tokens = jnp.pad(x_tokens, ((0, n_pad - n), (0, 0)))
    out = pl.pallas_call(
        _token_mlp_kernel,
        out_shape=jax.ShapeDtypeStruct((n_pad, D_GATES), jnp.float32),
        grid_spec=pltpu.PrefetchScalarGridSpec(
            num_scalar_prefetch=0,
            grid=(n_pad // tile,),
            in_specs=[
                pl.BlockSpec((tile, D_IN), lambda i: (i, 0)),
                pl.BlockSpec((D_IN, D_H1), lambda i: (0, 0)),
                pl.BlockSpec((1, D_H1), lambda i: (0, 0)),
                pl.BlockSpec((D_H1, D_H2), lambda i: (0, 0)),
                pl.BlockSpec((1, D_H2), lambda i: (0, 0)),
                pl.BlockSpec((D_H2, D_GATES), lambda i: (0, 0)),
                pl.BlockSpec((1, D_GATES), lambda i: (0, 0)),
            ],
            out_specs=pl.BlockSpec((tile, D_GATES), lambda i: (i, 0)),
        ),
        compiler_params=pltpu.CompilerParams(
            dimension_semantics=("parallel",)),
    )(x_tokens, w1, b1, w12, b12, wih0, bias0)
    return out


# ----------------------------------------------------------------------------
# Kernel 2: time-chunked 3-layer LSTM recurrence + fused classifier head
# ----------------------------------------------------------------------------
def _lstm_cell(gates, c_prev):
    # PyTorch gate order: i, f, g, o.
    # TODO(synk): gate slices sit at lane offsets 25/50/75 inside one vreg; a
    # 128-lane-aligned gate layout would remove the lane rotates on v6e/v7x.
    i_g = _sigmoid(gates[:, 0 * D_LSTM:1 * D_LSTM])
    f_g = _sigmoid(gates[:, 1 * D_LSTM:2 * D_LSTM])
    g_g = jnp.tanh(gates[:, 2 * D_LSTM:3 * D_LSTM])
    o_g = _sigmoid(gates[:, 3 * D_LSTM:4 * D_LSTM])
    c_new = f_g * c_prev + i_g * g_g
    h_new = o_g * jnp.tanh(c_new)
    return h_new, c_new


def _lstm_head_kernel(lens_ref, x_ref, whh0_ref, w12_ref, b12_ref,
                      w2_ref, b2_ref, ws_ref, bs_ref, o_ref,
                      h_scr, c_scr, hlast_scr):
    chunk = pl.program_id(0)
    tt = x_ref.shape[0]

    @pl.when(chunk == 0)
    def _init():
        h_scr[...] = jnp.zeros_like(h_scr)
        c_scr[...] = jnp.zeros_like(c_scr)
        hlast_scr[...] = jnp.zeros_like(hlast_scr)
        o_ref[...] = jnp.zeros_like(o_ref)

    lens = lens_ref[...]                    # (B, 1) int32
    base_t = chunk * tt

    def step(s, carry):
        h0, c0, h1, c1, h2, c2, hlast = carry
        t = base_t + s
        # Layer 0: x-projection + bias already folded in by kernel 1.
        g0 = x_ref[s] + jnp.dot(h0, whh0_ref[...],
                                preferred_element_type=jnp.float32)
        h0, c0 = _lstm_cell(g0, c0)
        # Layer 1: merged [W_ih; W_hh] matmul on concat([h_below, h_prev]).
        g1 = jnp.dot(jnp.concatenate([h0, h1], axis=-1), w12_ref[0],
                     preferred_element_type=jnp.float32) + b12_ref[0]
        h1, c1 = _lstm_cell(g1, c1)
        # Layer 2.
        g2 = jnp.dot(jnp.concatenate([h1, h2], axis=-1), w12_ref[1],
                     preferred_element_type=jnp.float32) + b12_ref[1]
        h2, c2 = _lstm_cell(g2, c2)
        # Record top-layer hidden at each sequence's last valid timestep.
        is_last = lens == (t + 1)
        hlast = jnp.where(is_last, h2, hlast)
        return h0, c0, h1, c1, h2, c2, hlast

    init = (h_scr[0], c_scr[0], h_scr[1], c_scr[1], h_scr[2], c_scr[2],
            hlast_scr[...])
    h0, c0, h1, c1, h2, c2, hlast = jax.lax.fori_loop(
        0, tt, step, init, unroll=True)

    h_scr[0], c_scr[0] = h0, c0
    h_scr[1], c_scr[1] = h1, c1
    h_scr[2], c_scr[2] = h2, c2
    hlast_scr[...] = hlast

    @pl.when(chunk == pl.num_programs(0) - 1)
    def _head():
        hh = jnp.dot(hlast, w2_ref[...],
                     preferred_element_type=jnp.float32) + b2_ref[...]
        hh = _leaky_relu(hh)
        logits = jnp.dot(hh, ws_ref[...],
                         preferred_element_type=jnp.float32) + bs_ref[...]
        m = jnp.max(logits, axis=-1, keepdims=True)
        e = jnp.exp(logits - m)
        o_ref[...] = (e / jnp.sum(e, axis=-1, keepdims=True)).astype(o_ref.dtype)


def lstm_head(gates_seq, lengths, whh0, w12_merged, b12, w2, b2, wsm, bsm,
              *, time_chunk=16):
    """gates_seq: (T, B, 100) f32 layer-0 gate pre-activations; -> (B, 10)."""
    t_steps, b, _ = gates_seq.shape
    tt = max(1, min(time_chunk, t_steps))
    t_pad = _round_up(t_steps, tt)
    b_pad = _round_up(max(b, 8), 8)
    if t_pad != t_steps or b_pad != b:
        gates_seq = jnp.pad(gates_seq, ((0, t_pad - t_steps),
                                        (0, b_pad - b), (0, 0)))
    lens2d = jnp.pad(lengths.astype(jnp.int32), (0, b_pad - b)).reshape(b_pad, 1)

    out = pl.pallas_call(
        _lstm_head_kernel,
        out_shape=jax.ShapeDtypeStruct((b_pad, N_CLS), jnp.float32),
        grid_spec=pltpu.PrefetchScalarGridSpec(
            num_scalar_prefetch=0,
            grid=(t_pad // tt,),
            in_specs=[
                pl.BlockSpec((b_pad, 1), lambda c: (0, 0)),               # lengths
                pl.BlockSpec((tt, b_pad, D_GATES), lambda c: (c, 0, 0)),  # gates0
                pl.BlockSpec((D_LSTM, D_GATES), lambda c: (0, 0)),        # W_hh l0
                pl.BlockSpec((N_LAYERS - 1, 2 * D_LSTM, D_GATES),
                             lambda c: (0, 0, 0)),                        # [Wih;Whh] l1,l2
                pl.BlockSpec((N_LAYERS - 1, 1, D_GATES),
                             lambda c: (0, 0, 0)),                        # biases l1,l2
                pl.BlockSpec((D_LSTM, D_H3), lambda c: (0, 0)),           # head W2
                pl.BlockSpec((1, D_H3), lambda c: (0, 0)),                # head b2
                pl.BlockSpec((D_H3, N_CLS), lambda c: (0, 0)),            # head Wsm
                pl.BlockSpec((1, N_CLS), lambda c: (0, 0)),               # head bsm
            ],
            out_specs=pl.BlockSpec((b_pad, N_CLS), lambda c: (0, 0)),
            scratch_shapes=[
                pltpu.VMEM((N_LAYERS, b_pad, D_LSTM), jnp.float32),       # h state
                pltpu.VMEM((N_LAYERS, b_pad, D_LSTM), jnp.float32),       # c state
                pltpu.VMEM((b_pad, D_LSTM), jnp.float32),                 # last hidden
            ],
        ),
        compiler_params=pltpu.CompilerParams(
            dimension_semantics=("arbitrary",)),
    )(lens2d, gates_seq, whh0, w12_merged, b12, w2, b2, wsm, bsm)
    return out[:b]


# ----------------------------------------------------------------------------
# Full forward (equivalent to InquiryAnalyzerLSTM.forward + _sequenceLabels)
# ----------------------------------------------------------------------------
def inquiry_analyzer_lstm_forward(x_pad, lengths, params, *, time_chunk=16):
    """x_pad: (B, T, 300) f32 padded sequences; lengths: (B,) int32 -> (B, 10).

    Assumes 1 <= lengths[i] <= T (PackedSequence cannot represent other cases).
    """
    b, t_steps, d = x_pad.shape
    assert d == D_IN

    bias0 = params["bias"][0:1]                                  # (1, 100)
    tokens = x_pad.reshape(b * t_steps, D_IN)
    gates = token_mlp_gates(tokens, params["w1"], params["b1"],
                            params["w12"], params["b12"],
                            params["wih0"], bias0)[: b * t_steps]  # (B*T, 100)
    # TODO(synk): the (B,T,100)->(T,B,100) transpose is still an XLA pass over
    # the gate tensor; a transposed-write out_spec in kernel 1 would remove it.
    gates_seq = gates.reshape(b, t_steps, D_GATES).transpose(1, 0, 2)

    # Merged [W_ih; W_hh] weights and folded biases for layers 1 and 2.
    w12_merged = jnp.concatenate([params["wih12"], params["whh"][1:]], axis=1)
    b12 = params["bias"][1:].reshape(N_LAYERS - 1, 1, D_GATES)

    return lstm_head(gates_seq, lengths, params["whh"][0], w12_merged, b12,
                     params["w2"], params["b2"], params["wsm"], params["bsm"],
                     time_chunk=time_chunk)


# ----------------------------------------------------------------------------
# Pure-JAX reference of the same math (for the correctness check).
# ----------------------------------------------------------------------------
def _reference_forward(x_pad, lengths, params):
    b = x_pad.shape[0]
    with jax.default_matmul_precision("highest"):
        h = _leaky_relu(x_pad @ params["w1"] + params["b1"])
        h = _leaky_relu(h @ params["w12"] + params["b12"])       # (B, T, 50)
        seq = jnp.transpose(h, (1, 0, 2))                        # (T, B, 50)

        def run_layer(seq_in, w_ih, w_hh, bias):
            def step(carry, x_t):
                h_prev, c_prev = carry
                gates = x_t @ w_ih + h_prev @ w_hh + bias
                i_g, f_g, g_g, o_g = jnp.split(gates, 4, axis=-1)
                i_g = jax.nn.sigmoid(i_g)
                f_g = jax.nn.sigmoid(f_g)
                g_g = jnp.tanh(g_g)
                o_g = jax.nn.sigmoid(o_g)
                c_t = f_g * c_prev + i_g * g_g
                h_t = o_g * jnp.tanh(c_t)
                return (h_t, c_t), h_t
            init = (jnp.zeros((b, D_LSTM), jnp.float32),
                    jnp.zeros((b, D_LSTM), jnp.float32))
            _, outs = jax.lax.scan(step, init, seq_in)
            return outs

        seq = run_layer(seq, params["wih0"], params["whh"][0], params["bias"][0])
        seq = run_layer(seq, params["wih12"][0], params["whh"][1], params["bias"][1])
        seq = run_layer(seq, params["wih12"][1], params["whh"][2], params["bias"][2])
        last = seq[lengths - 1, jnp.arange(b)]                   # (B, 25)
        h2 = _leaky_relu(last @ params["w2"] + params["b2"])
        logits = h2 @ params["wsm"] + params["bsm"]
        return jax.nn.softmax(logits, axis=-1)


if __name__ == "__main__":
    key = jax.random.PRNGKey(0)
    keys = jax.random.split(key, 16)

    B, T = 2, 8
    lengths = jnp.array([T, 5], dtype=jnp.int32)   # variable-length sequences

    def init(k, shape, scale=0.1):
        return scale * jax.random.normal(k, shape, dtype=jnp.float32)

    # Weights stored lane-dense as (in, out); LSTM biases folded (b_ih + b_hh).
    params = {
        "w1":    init(keys[0], (D_IN, D_H1)),
        "b1":    init(keys[1], (1, D_H1)),
        "w12":   init(keys[2], (D_H1, D_H2)),
        "b12":   init(keys[3], (1, D_H2)),
        "wih0":  init(keys[4], (D_H2, D_GATES)),
        "wih12": init(keys[5], (N_LAYERS - 1, D_LSTM, D_GATES)),
        "whh":   init(keys[6], (N_LAYERS, D_LSTM, D_GATES)),
        "bias":  init(keys[7], (N_LAYERS, D_GATES)),
        "w2":    init(keys[8], (D_LSTM, D_H3)),
        "b2":    init(keys[9], (1, D_H3)),
        "wsm":   init(keys[10], (D_H3, N_CLS)),
        "bsm":   init(keys[11], (1, N_CLS)),
    }

    x_pad = jax.random.normal(keys[12], (B, T, D_IN), dtype=jnp.float32)
    valid = (jnp.arange(T)[None, :] < lengths[:, None]).astype(jnp.float32)
    x_pad = x_pad * valid[:, :, None]   # mimic pad_sequence zero padding

    out = inquiry_analyzer_lstm_forward(x_pad, lengths, params)
    out = jax.block_until_ready(out)

    ref = _reference_forward(x_pad, lengths, params)
    assert out.shape == (B, N_CLS)
    assert jnp.allclose(jnp.sum(out, axis=-1), 1.0, atol=1e-4), \
        "softmax rows must sum to 1"
    assert jnp.allclose(out, ref, atol=2e-3, rtol=2e-3), \
        float(jnp.max(jnp.abs(out - ref)))

    print("KERNEL_OK")
</pallas_src>

<mosaic_0001>
module attributes {stable_mosaic.version = 11 : i64} {
  func.func @_token_mlp_kernel(%arg0: i32, %arg1: memref<16x300xf32, #tpu.memory_space<vmem>>, %arg2: memref<300x100xf32, #tpu.memory_space<vmem>>, %arg3: memref<1x100xf32, #tpu.memory_space<vmem>>, %arg4: memref<100x50xf32, #tpu.memory_space<vmem>>, %arg5: memref<1x50xf32, #tpu.memory_space<vmem>>, %arg6: memref<50x100xf32, #tpu.memory_space<vmem>>, %arg7: memref<1x100xf32, #tpu.memory_space<vmem>>, %arg8: memref<16x100xf32, #tpu.memory_space<vmem>>) attributes {dimension_semantics = [#tpu.dimension_semantics<parallel>], iteration_bounds = array<i64: 1>, scalar_prefetch = 0 : i64, scratch_operands = 0 : i64, tpu.core_type = #tpu.core_type<tc>, window_params = [{transform_indices = @transform_0, window_bounds = array<i64: 16, 300>}, {pipeline_mode = #tpu.pipeline_mode<synchronous>, transform_indices = @transform_1, window_bounds = array<i64: 300, 100>}, {pipeline_mode = #tpu.pipeline_mode<synchronous>, transform_indices = @transform_2, window_bounds = array<i64: 1, 100>}, {pipeline_mode = #tpu.pipeline_mode<synchronous>, transform_indices = @transform_3, window_bounds = array<i64: 100, 50>}, {pipeline_mode = #tpu.pipeline_mode<synchronous>, transform_indices = @transform_4, window_bounds = array<i64: 1, 50>}, {pipeline_mode = #tpu.pipeline_mode<synchronous>, transform_indices = @transform_5, window_bounds = array<i64: 50, 100>}, {pipeline_mode = #tpu.pipeline_mode<synchronous>, transform_indices = @transform_6, window_bounds = array<i64: 1, 100>}, {transform_indices = @transform_7, window_bounds = array<i64: 16, 100>}]} {
    %c0 = arith.constant 0 : index
    %c0_0 = arith.constant 0 : index
    %0 = vector.load %arg1[%c0, %c0_0] : memref<16x300xf32, #tpu.memory_space<vmem>>, vector<16x300xf32>
    %c0_1 = arith.constant 0 : index
    %c0_2 = arith.constant 0 : index
    %1 = vector.load %arg2[%c0_1, %c0_2] : memref<300x100xf32, #tpu.memory_space<vmem>>, vector<300x100xf32>
    %cst = arith.constant dense<0.000000e+00> : vector<16x100xf32>
    %2 = tpu.matmul %0, %1, %cst {dimension_numbers = #tpu.dot_dimension_numbers<[1], [0], [0], [1], [0, 0, 1, 1], [], []>} : vector<16x300xf32>, vector<300x100xf32>, vector<16x100xf32> -> vector<16x100xf32>
    %c0_3 = arith.constant 0 : index
    %c0_4 = arith.constant 0 : index
    %3 = vector.load %arg3[%c0_3, %c0_4] : memref<1x100xf32, #tpu.memory_space<vmem>>, vector<1x100xf32>
    %4 = vector.broadcast %3 : vector<1x100xf32> to vector<16x100xf32>
    %5 = arith.addf %2, %4 : vector<16x100xf32>
    %cst_5 = arith.constant 0.000000e+00 : f32
    %6 = vector.broadcast %cst_5 : f32 to vector<16x100xf32>
    %7 = arith.cmpf oge, %5, %6 : vector<16x100xf32>
    %cst_6 = arith.constant 0.699999988 : f32
    %8 = vector.broadcast %cst_6 : f32 to vector<16x100xf32>
    %9 = arith.mulf %8, %5 : vector<16x100xf32>
    %10 = arith.select %7, %5, %9 : vector<16x100xi1>, vector<16x100xf32>
    %c0_7 = arith.constant 0 : index
    %c0_8 = arith.constant 0 : index
    %11 = vector.load %arg4[%c0_7, %c0_8] : memref<100x50xf32, #tpu.memory_space<vmem>>, vector<100x50xf32>
    %cst_9 = arith.constant dense<0.000000e+00> : vector<16x50xf32>
    %12 = tpu.matmul %10, %11, %cst_9 {dimension_numbers = #tpu.dot_dimension_numbers<[1], [0], [0], [1], [0, 0, 1, 1], [], []>} : vector<16x100xf32>, vector<100x50xf32>, vector<16x50xf32> -> vector<16x50xf32>
    %c0_10 = arith.constant 0 : index
    %c0_11 = arith.constant 0 : index
    %13 = vector.load %arg5[%c0_10, %c0_11] : memref<1x50xf32, #tpu.memory_space<vmem>>, vector<1x50xf32>
    %14 = vector.broadcast %13 : vector<1x50xf32> to vector<16x50xf32>
    %15 = arith.addf %12, %14 : vector<16x50xf32>
    %cst_12 = arith.constant 0.000000e+00 : f32
    %16 = vector.broadcast %cst_12 : f32 to vector<16x50xf32>
    %17 = arith.cmpf oge, %15, %16 : vector<16x50xf32>
    %cst_13 = arith.constant 0.699999988 : f32
    %18 = vector.broadcast %cst_13 : f32 to vector<16x50xf32>
    %19 = arith.mulf %18, %15 : vector<16x50xf32>
    %20 = arith.select %17, %15, %19 : vector<16x50xi1>, vector<16x50xf32>
    %c0_14 = arith.constant 0 : index
    %c0_15 = arith.constant 0 : index
    %21 = vector.load %arg6[%c0_14, %c0_15] : memref<50x100xf32, #tpu.memory_space<vmem>>, vector<50x100xf32>
    %cst_16 = arith.constant dense<0.000000e+00> : vector<16x100xf32>
    %22 = tpu.matmul %20, %21, %cst_16 {dimension_numbers = #tpu.dot_dimension_numbers<[1], [0], [0], [1], [0, 0, 1, 1], [], []>} : vector<16x50xf32>, vector<50x100xf32>, vector<16x100xf32> -> vector<16x100xf32>
    %c0_17 = arith.constant 0 : index
    %c0_18 = arith.constant 0 : index
    %23 = vector.load %arg7[%c0_17, %c0_18] : memref<1x100xf32, #tpu.memory_space<vmem>>, vector<1x100xf32>
    %24 = vector.broadcast %23 : vector<1x100xf32> to vector<16x100xf32>
    %25 = arith.addf %22, %24 : vector<16x100xf32>
    %c0_19 = arith.constant 0 : index
    %c0_20 = arith.constant 0 : index
    %26 = vector.load %arg8[%c0_19, %c0_20] : memref<16x100xf32, #tpu.memory_space<vmem>>, vector<16x100xf32>
    tpu.vector_store %arg8[%c0_19, %c0_20], %25 {strides = array<i32>} : memref<16x100xf32, #tpu.memory_space<vmem>>, vector<16x100xf32>,
    return
  }
  func.func @transform_0(%arg0: i32) -> (i32, i32) {
    %c0_i32 = arith.constant 0 : i32
    %c0_i32_0 = arith.constant 0 : i32
    return %arg0, %c0_i32 : i32, i32
  }
  func.func @transform_1(%arg0: i32) -> (i32, i32) {
    %c0_i32 = arith.constant 0 : i32
    %c0_i32_0 = arith.constant 0 : i32
    %c0_i32_1 = arith.constant 0 : i32
    return %c0_i32, %c0_i32_0 : i32, i32
  }
  func.func @transform_2(%arg0: i32) -> (i32, i32) {
    %c0_i32 = arith.constant 0 : i32
    %c0_i32_0 = arith.constant 0 : i32
    %c0_i32_1 = arith.constant 0 : i32
    return %c0_i32, %c0_i32_0 : i32, i32
  }
  func.func @transform_3(%arg0: i32) -> (i32, i32) {
    %c0_i32 = arith.constant 0 : i32
    %c0_i32_0 = arith.constant 0 : i32
    %c0_i32_1 = arith.constant 0 : i32
    return %c0_i32, %c0_i32_0 : i32, i32
  }
  func.func @transform_4(%arg0: i32) -> (i32, i32) {
    %c0_i32 = arith.constant 0 : i32
    %c0_i32_0 = arith.constant 0 : i32
    %c0_i32_1 = arith.constant 0 : i32
    return %c0_i32, %c0_i32_0 : i32, i32
  }
  func.func @transform_5(%arg0: i32) -> (i32, i32) {
    %c0_i32 = arith.constant 0 : i32
    %c0_i32_0 = arith.constant 0 : i32
    %c0_i32_1 = arith.constant 0 : i32
    return %c0_i32, %c0_i32_0 : i32, i32
  }
  func.func @transform_6(%arg0: i32) -> (i32, i32) {
    %c0_i32 = arith.constant 0 : i32
    %c0_i32_0 = arith.constant 0 : i32
    %c0_i32_1 = arith.constant 0 : i32
    return %c0_i32, %c0_i32_0 : i32, i32
  }
  func.func @transform_7(%arg0: i32) -> (i32, i32) {
    %c0_i32 = arith.constant 0 : i32
    %c0_i32_0 = arith.constant 0 : i32
    return %arg0, %c0_i32 : i32, i32
  }
}

</mosaic_0001>

<llo_original>
// kernel: tpu_custom_call.1
$region0: #{tpu_custom_call.1}
  #allocation0 [shape = 'u32[]', space=smem, size = 0x4, offset = 0x4, fixed_abs, tag = 'smem constant byte address 0x4 - core index']
  #allocation1 [shape = 'u32[72,128]{1,0:T(1,128)}', space=vmem, size = 0x9000, scoped, tag = 'internal scratch']
  %s0 = inlined_call_operand.vmem [shape: f32[16,300], index: 0, kind: input, shape index: {}]
  %s1 = inlined_call_operand.hbm [shape: f32[300,100], index: 1, kind: input, shape index: {}]
  %s2 = inlined_call_operand.vmem [shape: f32[1,100], index: 2, kind: input, shape index: {}]
  %s3 = inlined_call_operand.vmem [shape: f32[100,50], index: 3, kind: input, shape index: {}]
  %s4 = inlined_call_operand.vmem [shape: f32[1,50], index: 4, kind: input, shape index: {}]
  %s5 = inlined_call_operand.vmem [shape: f32[50,100], index: 5, kind: input, shape index: {}]
  %s6 = inlined_call_operand.vmem [shape: f32[1,100], index: 6, kind: input, shape index: {}]
  %s7 = inlined_call_operand.hbm [shape: f32[16,100], index: 7, kind: output, shape index: {}]
  %s8 = sld [smem:[#allocation0]]
  $region42: #{tpu_custom_call.1} parent=0
    _
  %s10 = ssub.s32 1, %s8
  %s11 = scalar_select 0, %s10, %s8
  $region1: #{tpu_custom_call.1} parent=0
    #allocation2 [shape = 'u8[155648]{0}', space=vmem, size = 0x26000, scoped, tag = 'input window, operand 1, single buffered']
    #allocation3 [shape = 's32[1]{0}', space=sflag, size = 0x4, scoped, tag = 'scoped memory for tpu_custom_call.1']
    #allocation4 [shape = 's32[1]{0}', space=sflag, size = 0x4, scoped, tag = 'scoped memory for tpu_custom_call.1']
    #allocation5 [shape = 'u8[8192]{0}', space=vmem, size = 0x2000, scoped, tag = 'output window, operand 0, single buffered']
    %12 = vsyncpa [#allocation3], 0
    %13 = vsyncpa [#allocation4], 0
    // Predicated region
    $region2: #{tpu_custom_call.1} parent=1 // pred_check
      _
    $region3: #{tpu_custom_call.1} parent=1 // pred_check_branch
      %15 = sbr.rel (0) target = $region5
    $region4: #{tpu_custom_call.1} parent=1 // pred_region
      _
    $region5: #{tpu_custom_call.1} parent=1 // pred_fallthru
      _
    // Predicated region
    $region6: #{tpu_custom_call.1} parent=1 // pred_check
      _
    $region7: #{tpu_custom_call.1} parent=1 // pred_check_branch
      %17 = sbr.rel (0) target = $region9
    $region8: #{tpu_custom_call.1} parent=1 // pred_region
      %19 = vsyncadd [#allocation3], 0
      %s20 = sshll.u32 %s1, 4
      %s21 = int_to_ptr.hbm [resolvable:$true] %s20
      %s22 = sshll.u32 [#allocation2], 4
      %s23 = int_to_ptr.vmem [resolvable:$true] %s22
      %28 = dma.hbm_to_vmem [thread:$0]  %s21, 4864, %s23, [#allocation3], 128, 128, 8
    $region9: #{tpu_custom_call.1} parent=1 // pred_fallthru
      _
    // Predicated region
    $region10: #{tpu_custom_call.1} parent=1 // pred_check
      _
    $region11: #{tpu_custom_call.1} parent=1 // pred_check_branch
      %30 = sbr.rel (0) target = $region13
    $region12: #{tpu_custom_call.1} parent=1 // pred_region
      _
    $region13: #{tpu_custom_call.1} parent=1 // pred_fallthru
      _
    // Predicated region
    $region14: #{tpu_custom_call.1} parent=1 // pred_check
      _
    $region15: #{tpu_custom_call.1} parent=1 // pred_check_branch
      %32 = sbr.rel (0) target = $region17
    $region16: #{tpu_custom_call.1} parent=1 // pred_region
      _
    $region17: #{tpu_custom_call.1} parent=1 // pred_fallthru
      _
    // Predicated region
    $region18: #{tpu_custom_call.1} parent=1 // pred_check
      _
    $region19: #{tpu_custom_call.1} parent=1 // pred_check_branch
      %34 = sbr.rel (0) target = $region21
    $region20: #{tpu_custom_call.1} parent=1 // pred_region
      _
    $region21: #{tpu_custom_call.1} parent=1 // pred_fallthru
      _
    // Predicated region
    $region22: #{tpu_custom_call.1} parent=1 // pred_check
      _
    $region23: #{tpu_custom_call.1} parent=1 // pred_check_branch
      %36 = sbr.rel (0) target = $region25
    $region24: #{tpu_custom_call.1} parent=1 // pred_region
      _
    $region25: #{tpu_custom_call.1} parent=1 // pred_fallthru
      _
    // Predicated region
    $region26: #{tpu_custom_call.1} parent=1 // pred_check
      _
    $region27: #{tpu_custom_call.1} parent=1 // pred_check_branch
      %38 = sbr.rel (0) target = $region29
    $region28: #{tpu_custom_call.1} parent=1 // pred_region
      _
    $region29: #{tpu_custom_call.1} parent=1 // pred_fallthru
      _
    // Predicated region
    $region30: #{tpu_custom_call.1} parent=1 // pred_check
      _
    $region31: #{tpu_custom_call.1} parent=1 // pred_check_branch
      %40 = sbr.rel (0) target = $region33
    $region32: #{tpu_custom_call.1} parent=1 // pred_region
      %42 = dma.done [#allocation3], 4864
    $region33: #{tpu_custom_call.1} parent=1 // pred_fallthru
      _
    %v43 = vld [vmem:[%s0] sm:$0xff]
    %v44 = vld [vmem:[%s0 + $0x8] sm:$0xff]
    %v45 = vld [vmem:[%s0 + $0x10] sm:$0xff]
    %v46 = vld [vmem:[%s0 + $0x18] sm:$0xff]
    %v47 = vld [vmem:[%s0 + $0x20] sm:$0xff]
    %v48 = vld [vmem:[%s0 + $0x28] sm:$0xff]
    %v49 = vld [vmem:[#allocation2] sm:$0xff]
    %v50 = vld [vmem:[#allocation2 + $0x8] sm:$0xff]
    %v51 = vld [vmem:[#allocation2 + $0x10] sm:$0xff]
    %v52 = vld [vmem:[#allocation2 + $0x18] sm:$0xff]
    %v53 = vld [vmem:[#allocation2 + $0x20] sm:$0xff]
    %v54 = vld [vmem:[#allocation2 + $0x28] sm:$0xff]
    %v55 = vld [vmem:[#allocation2 + $0x30] sm:$0xff]
    %v56 = vld [vmem:[#allocation2 + $0x38] sm:$0xff]
    %v57 = vld [vmem:[#allocation2 + $0x40] sm:$0xff]
    %v58 = vld [vmem:[#allocation2 + $0x48] sm:$0xff]
    %v59 = vld [vmem:[#allocation2 + $0x50] sm:$0xff]
    %v60 = vld [vmem:[#allocation2 + $0x58] sm:$0xff]
    %v61 = vld [vmem:[#allocation2 + $0x60] sm:$0xff]
    %v62 = vld [vmem:[#allocation2 + $0x68] sm:$0xff]
    %v63 = vld [vmem:[#allocation2 + $0x70] sm:$0xff]
    %v64 = vld [vmem:[#allocation2 + $0x78] sm:$0xff]
    %v65 = vld [vmem:[#allocation2 + $0x80] sm:$0xff]
    %v66 = vld [vmem:[#allocation2 + $0x88] sm:$0xff]
    %v67 = vld [vmem:[#allocation2 + $0x90] sm:$0xff]
    %v68 = vld [vmem:[#allocation2 + $0x98] sm:$0xff]
    %v69 = vld [vmem:[#allocation2 + $0xa0] sm:$0xff]
    %v70 = vld [vmem:[#allocation2 + $0xa8] sm:$0xff]
    %v71 = vld [vmem:[#allocation2 + $0xb0] sm:$0xff]
    %v72 = vld [vmem:[#allocation2 + $0xb8] sm:$0xff]
    %v73 = vld [vmem:[#allocation2 + $0xc0] sm:$0xff]
    %v74 = vld [vmem:[#allocation2 + $0xc8] sm:$0xff]
    %v75 = vld [vmem:[#allocation2 + $0xd0] sm:$0xff]
    %v76 = vld [vmem:[#allocation2 + $0xd8] sm:$0xff]
    %v77 = vld [vmem:[#allocation2 + $0xe0] sm:$0xff]
    %v78 = vld [vmem:[#allocation2 + $0xe8] sm:$0xff]
    %v79 = vld [vmem:[#allocation2 + $0xf0] sm:$0xff]
    %v80 = vld [vmem:[#allocation2 + $0xf8] sm:$0xff]
    %v81 = vld [vmem:[#allocation2 + $0x100] sm:$0xff]
    %v82 = vld [vmem:[#allocation2 + $0x108] sm:$0xff]
    %v83 = vld [vmem:[#allocation2 + $0x110] sm:$0xff]
    %v84 = vld [vmem:[#allocation2 + $0x118] sm:$0xff]
    %v85 = vld [vmem:[#allocation2 + $0x120] sm:$0xff]
    %v86 = vld [vmem:[#allocation2 + $0x128] sm:$0xf]
    %v87 = vld [vmem:[%s2] sm:$0x1]
    %v89 = vperm.slane %v87, 0
    %vm91 = vcmask 359424
    %v93 = vsel %vm91, %v45, 0
    %v96 = vsel %vm91, %v48, 0
    %vm98 = vcmask 1043456
    %v100 = vsel %vm98, %v86, 0
    %102 = vmatpush.msra.mxu0 %v64
    %103 = vmatpush.msra.mxu0 %v63
    %104 = vmatpush.msra.mxu0 %v62
    %105 = vmatpush.msra.mxu0 %v61
    %106 = vmatpush.msra.mxu0 %v60
    %107 = vmatpush.msra.mxu0 %v59
    %108 = vmatpush.msra.mxu0 %v58
    %109 = vmatpush.msra.mxu0 %v57
    %110 = vmatpush.msra.mxu0 %v56
    %111 = vmatpush.msra.mxu0 %v55
    %112 = vmatpush.msra.mxu0 %v54
    %113 = vmatpush.msra.mxu0 %v53
    %114 = vmatpush.msra.mxu0 %v52
    %115 = vmatpush.msra.mxu0 %v51
    %116 = vmatpush.msra.mxu0 %v50
    %117 = vmatpush.msra.mxu0 %v49
    %118 = vmatmul.f32.gmra.mxu0 %v43
    %v119 = vpop.f32.mrf.mxu0
    %v120 = vadd.f32 %v89, %v119
    %121 = vmatmul.f32.gmra.mxu0 %v46
    %v122 = vpop.f32.mrf.mxu0
    %v123 = vadd.f32 %v89, %v122
    %124 = vdwg.mxu0
    %125 = vmatpush.msra.mxu0 %v80
    %126 = vmatpush.msra.mxu0 %v79
    %127 = vmatpush.msra.mxu0 %v78
    %128 = vmatpush.msra.mxu0 %v77
    %129 = vmatpush.msra.mxu0 %v76
    %130 = vmatpush.msra.mxu0 %v75
    %131 = vmatpush.msra.mxu0 %v74
    %132 = vmatpush.msra.mxu0 %v73
    %133 = vmatpush.msra.mxu0 %v72
    %134 = vmatpush.msra.mxu0 %v71
    %135 = vmatpush.msra.mxu0 %v70
    %136 = vmatpush.msra.mxu0 %v69
    %137 = vmatpush.msra.mxu0 %v68
    %138 = vmatpush.msra.mxu0 %v67
    %139 = vmatpush.msra.mxu0 %v66
    %140 = vmatpush.msra.mxu0 %v65
    %141 = vmatmul.f32.gmra.mxu0 %v44
    %v142 = vpop.f32.mrf.mxu0
    %v143 = vadd.f32 %v120, %v142
    %144 = vmatmul.f32.gmra.mxu0 %v47
    %v145 = vpop.f32.mrf.mxu0
    %v146 = vadd.f32 %v123, %v145
    %147 = vdwg.mxu0
    %148 = vmatpush.msra.mxu0 0.0
    %149 = vmatpush.msra.mxu0 0.0
    %150 = vmatpush.msra.mxu0 0.0
    %151 = vmatpush.msra.mxu0 0.0
    %152 = vmatpush.msra.mxu0 0.0
    %153 = vmatpush.msra.mxu0 0.0
    %154 = vmatpush.msra.mxu0 0.0
    %155 = vmatpush.msra.mxu0 0.0
    %156 = vmatpush.msra.mxu0 0.0
    %157 = vmatpush.msra.mxu0 0.0
    %158 = vmatpush.msra.mxu0 %v100
    %159 = vmatpush.msra.mxu0 %v85
    %160 = vmatpush.msra.mxu0 %v84
    %161 = vmatpush.msra.mxu0 %v83
    %162 = vmatpush.msra.mxu0 %v82
    %163 = vmatpush.msra.mxu0 %v81
    %164 = vmatmul.f32.gmra.mxu0 %v93
    %v165 = vpop.f32.mrf.mxu0
    %v166 = vadd.f32 %v143, %v165
    %167 = vmatmul.f32.gmra.mxu0 %v96
    %v168 = vpop.f32.mrf.mxu0
    %v169 = vadd.f32 %v146, %v168
    %170 = vdwg.mxu0
    %vm171 = vcmp.ge.f32.partialorder %v166, 0.0
    %vm172 = vcmp.ge.f32.partialorder %v169, 0.0
    %v173 = vmul.f32 %v166, 0.7
    %v174 = vmul.f32 %v169, 0.7
    %v175 = vsel %vm171, %v166, %v173
    %v176 = vsel %vm172, %v169, %v174
    %v177 = vld [vmem:[%s3] sm:$0xff]
    %v178 = vld [vmem:[%s3 + $0x8] sm:$0xff]
    %v179 = vld [vmem:[%s3 + $0x10] sm:$0xff]
    %v180 = vld [vmem:[%s3 + $0x18] sm:$0xff]
    %v181 = vld [vmem:[%s3 + $0x20] sm:$0xff]
    %v182 = vld [vmem:[%s3 + $0x28] sm:$0xff]
    %v183 = vld [vmem:[%s3 + $0x30] sm:$0xff]
    %v184 = vld [vmem:[%s3 + $0x38] sm:$0xff]
    %v185 = vld [vmem:[%s3 + $0x40] sm:$0xff]
    %v186 = vld [vmem:[%s3 + $0x48] sm:$0xff]
    %v187 = vld [vmem:[%s3 + $0x50] sm:$0xff]
    %v188 = vld [vmem:[%s3 + $0x58] sm:$0xff]
    %v189 = vld [vmem:[%s3 + $0x60] sm:$0xf]
    %v190 = vld [vmem:[%s4] sm:$0x1]
    %v192 = vperm.slane %v190, 0
    %vm194 = vcmask 818176
    %v196 = vsel %vm194, %v175, 0
    %v199 = vsel %vm194, %v176, 0
    %v202 = vsel %vm98, %v189, 0
    %204 = vmatpush.msra.mxu0 0.0
    %205 = vmatpush.msra.mxu0 0.0
    %206 = vmatpush.msra.mxu0 0.0
    %207 = vmatpush.msra.mxu0 %v202
    %208 = vmatpush.msra.mxu0 %v188
    %209 = vmatpush.msra.mxu0 %v187
    %210 = vmatpush.msra.mxu0 %v186
    %211 = vmatpush.msra.mxu0 %v185
    %212 = vmatpush.msra.mxu0 %v184
    %213 = vmatpush.msra.mxu0 %v183
    %214 = vmatpush.msra.mxu0 %v182
    %215 = vmatpush.msra.mxu0 %v181
    %216 = vmatpush.msra.mxu0 %v180
    %217 = vmatpush.msra.mxu0 %v179
    %218 = vmatpush.msra.mxu0 %v178
    %219 = vmatpush.msra.mxu0 %v177
    %220 = vmatmul.f32.gmra.mxu0 %v196
    %v221 = vpop.f32.mrf.mxu0
    %v222 = vadd.f32 %v192, %v221
    %223 = vmatmul.f32.gmra.mxu0 %v199
    %v224 = vpop.f32.mrf.mxu0
    %v225 = vadd.f32 %v192, %v224
    %226 = vdwg.mxu0
    %vm227 = vcmp.ge.f32.partialorder %v222, 0.0
    %vm228 = vcmp.ge.f32.partialorder %v225, 0.0
    %v229 = vmul.f32 %v222, 0.7
    %v230 = vmul.f32 %v225, 0.7
    %v231 = vsel %vm227, %v222, %v229
    %v232 = vsel %vm228, %v225, %v230
    %v233 = vld [vmem:[%s5] sm:$0xff]
    %v234 = vld [vmem:[%s5 + $0x8] sm:$0xff]
    %v235 = vld [vmem:[%s5 + $0x10] sm:$0xff]
    %v236 = vld [vmem:[%s5 + $0x18] sm:$0xff]
    %v237 = vld [vmem:[%s5 + $0x20] sm:$0xff]
    %v238 = vld [vmem:[%s5 + $0x28] sm:$0xff]
    %v239 = vld [vmem:[%s5 + $0x30] sm:$0x3]
    %v240 = vld [vmem:[%s6] sm:$0x1]
    %v242 = vperm.slane %v240, 0
    %vm244 = vcmask 408576
    %v246 = vsel %vm244, %v231, 0
    %v249 = vsel %vm244, %v232, 0
    %vm251 = vcmask 1041408
    %v253 = vsel %vm251, %v239, 0
    %255 = vmatpush.msra.mxu0 0.0
    %256 = vmatpush.msra.mxu0 0.0
    %257 = vmatpush.msra.mxu0 0.0
    %258 = vmatpush.msra.mxu0 0.0
    %259 = vmatpush.msra.mxu0 0.0
    %260 = vmatpush.msra.mxu0 0.0
    %261 = vmatpush.msra.mxu0 0.0
    %262 = vmatpush.msra.mxu0 0.0
    %263 = vmatpush.msra.mxu0 0.0
    %264 = vmatpush.msra.mxu0 %v253
    %265 = vmatpush.msra.mxu0 %v238
    %266 = vmatpush.msra.mxu0 %v237
    %267 = vmatpush.msra.mxu0 %v236
    %268 = vmatpush.msra.mxu0 %v235
    %269 = vmatpush.msra.mxu0 %v234
    %270 = vmatpush.msra.mxu0 %v233
    %271 = vmatmul.f32.gmra.mxu0 %v246
    %v272 = vpop.f32.mrf.mxu0
    %v273 = vadd.f32 %v242, %v272
    %274 = vmatmul.f32.gmra.mxu0 %v249
    %v275 = vpop.f32.mrf.mxu0
    %v276 = vadd.f32 %v242, %v275
    %277 = vdwg.mxu0
    %278 = vst.msk [vmem:[#allocation5] sm:$0xff] %vm194, %v273
    %279 = vst.msk [vmem:[#allocation5 + $0x8] sm:$0xff] %vm194, %v276
    // Predicated region
    $region34: #{tpu_custom_call.1} parent=1 // pred_check
      _
    $region35: #{tpu_custom_call.1} parent=1 // pred_check_branch
      %281 = sbr.rel (0) target = $region37
    $region36: #{tpu_custom_call.1} parent=1 // pred_region
      %283 = vsyncadd [#allocation4], 0
      %s284 = sshll.u32 [#allocation5], 4
      %s285 = int_to_ptr.vmem [resolvable:$true] %s284
      %s286 = sshll.u32 %s7, 4
      %s287 = int_to_ptr.hbm [resolvable:$true] %s286
      %292 = dma.vmem_to_hbm [thread:$0]  %s285, 256, %s287, [#allocation4], 128, 128, 8
    $region37: #{tpu_custom_call.1} parent=1 // pred_fallthru
      _
    // Predicated region
    $region38: #{tpu_custom_call.1} parent=1 // pred_check
      _
    $region39: #{tpu_custom_call.1} parent=1 // pred_check_branch
      %294 = sbr.rel (0) target = $region41
    $region40: #{tpu_custom_call.1} parent=1 // pred_region
      %296 = dma.done [#allocation4], 256
    $region41: #{tpu_custom_call.1} parent=1 // pred_fallthru
      _
    %297 = vsyncpa [#allocation3], 1
    %298 = vsyncpa [#allocation4], 1

</llo_original>
